<compile_context>
chip_gen: v7x
topology: tpu7x:2x2x1
jax: 0.10.0
libtpu: 0.0.40
codegen_flags: <defaults>
</compile_context>

<pallas_src>
import jax
import jax.numpy as jnp
from jax import lax
from jax.experimental import pallas as pl
from jax.experimental.pallas import tpu as pltpu

BN_EPS = 1e-5


def _silu(x):
    # sigmoid(x) = 0.5 * (tanh(0.5*x) + 1): tanh runs on the EUP (free slot),
    # avoiding the VALU divide of the hand-rolled 1/(1+exp(-x)).
    return x * (0.5 * jnp.tanh(0.5 * x) + 0.5)


def cond_embed_kernel(params_ref, t_ref, linw_ref, out_ref):
    # params (SMEM f32[12]):
    #  [0:3] conv0 weight (per input channel), [3] conv0 bias,
    #  [4] bn gamma, [5] bn beta,
    #  [6] conv1 w, [7] conv1 b, [8] conv2 w, [9] conv2 b,
    #  [10] linear bias, [11] sum(linear weight)   (precomputed in wrapper)
    w0_0 = params_ref[0]
    w0_1 = params_ref[1]
    w0_2 = params_ref[2]
    b0 = params_ref[3]
    gamma = params_ref[4]
    beta = params_ref[5]
    w1 = params_ref[6]
    b1 = params_ref[7]
    w2 = params_ref[8]
    b2 = params_ref[9]
    lin_b = params_ref[10]
    sum_lw = params_ref[11]

    # Channel slabs, each (W, B*H): W on sublanes, B*H on lanes.
    c0 = t_ref[0]
    c1 = t_ref[1]
    c2 = t_ref[2]
    W, BH = c0.shape

    # conv0: 1x1 conv 3->1 channels == per-channel scalar weighted sum + bias.
    x0 = c0 * w0_0 + c1 * w0_1 + c2 * w0_2 + b0            # (W, BH)

    # BatchNorm2d(1), training-mode batch statistics (biased variance).
    # Single pass: s1 / s2 are independent reductions (overlap on XLU),
    # affine folded into one scale `a` and shift `c`.
    n = float(W * BH)
    s1 = jnp.sum(x0)
    s2 = jnp.sum(x0 * x0)
    mean = s1 / n
    var = s2 / n - mean * mean
    a = gamma * lax.rsqrt(var + BN_EPS)
    c = beta - mean * a
    t0 = _silu(x0 * a + c)

    # conv1 (1x1, 1->1) -> SiLU. conv2 (w2, b2) is folded after the reduction.
    s = _silu(t0 * w1 + b1)                                 # (W, BH)

    # Linear(dim=W, 1): per-column dot with lin_w == VPU multiply + sublane
    # reduction (XLU). Produces one lane-major row (1, BH).
    red = jnp.sum(s * linw_ref[...], axis=0, keepdims=True)  # (1, BH)

    # Fold conv2 algebraically: out = w2 * red + (b2 * sum(lin_w) + lin_b).
    out_ref[...] = w2 * red + (b2 * sum_lw + lin_b)


def conditional_embedding(t, params, lin_w):
    """t: (B, 3, H, W) f32; params: f32[11]; lin_w: (W, 1) f32 -> (B, H)."""
    B, C, H, W = t.shape
    assert C == 3

    # Wrapper-side layout plumbing (pure XLA, outside the kernel):
    #   (B, 3, H, W) -> (3, W, B*H); element [c, w, b*H + h] = t[b, c, h, w].
    t_r = jnp.transpose(t, (1, 3, 0, 2)).reshape(3, W, B * H)

    # Append sum(lin_w) so conv2's bias collapses to one scalar in-kernel.
    params12 = jnp.concatenate(
        [params.astype(jnp.float32), jnp.sum(lin_w).reshape(1)]
    )

    n = B * H * W
    out = pl.pallas_call(
        cond_embed_kernel,
        out_shape=jax.ShapeDtypeStruct((1, B * H), jnp.float32),
        in_specs=[
            pl.BlockSpec(memory_space=pltpu.MemorySpace.SMEM),   # scalar params
            pl.BlockSpec(memory_space=pltpu.MemorySpace.VMEM),   # t (3, W, B*H)
            pl.BlockSpec(memory_space=pltpu.MemorySpace.VMEM),   # linear weight (W, 1)
        ],
        out_specs=pl.BlockSpec(memory_space=pltpu.MemorySpace.VMEM),
        cost_estimate=pl.CostEstimate(
            flops=30 * n,
            transcendentals=2 * n,
            bytes_accessed=t.size * 4 + lin_w.size * 4 + B * H * 4,
        ),
    )(params12, t_r, lin_w)

    # Lane-major (1, B*H) row -> (B, H); matches PyTorch .view(B, -1).
    return out.reshape(B, H)


def reference(t, params, lin_w):
    """Pure-JAX reference with identical semantics (for self-check)."""
    w0 = params[0:3]
    b0, gamma, beta = params[3], params[4], params[5]
    w1, b1, w2, b2, lin_b = params[6], params[7], params[8], params[9], params[10]
    x0 = jnp.einsum("bchw,c->bhw", t, w0) + b0
    mean = jnp.mean(x0)
    var = jnp.mean((x0 - mean) ** 2)
    y = gamma * (x0 - mean) / jnp.sqrt(var + BN_EPS) + beta
    silu = lambda x: x * jax.nn.sigmoid(x)
    emb = silu(silu(y) * w1 + b1) * w2 + b2
    return jnp.einsum("bhw,w->bh", emb, lin_w[:, 0]) + lin_b


if __name__ == "__main__":
    B, H, W = 2, 16, 16          # dim == W == 16; d_model / num_labels unused in forward
    key = jax.random.PRNGKey(0)
    k_t, k_p, k_l = jax.random.split(key, 3)

    t = jax.random.normal(k_t, (B, 3, H, W), dtype=jnp.float32)

    # Deterministic synthetic parameters (shapes from the module __init__):
    # conv0: (1,3,1,1) weight + (1,) bias; conv1/conv2: (1,1,1,1) weight + (1,) bias
    # batch_norm1: gamma=1, beta=0 (fresh init); linear: (1, dim) weight + (1,) bias
    pw = jax.random.normal(k_p, (8,), dtype=jnp.float32) * 0.5
    params = jnp.array(
        [pw[0], pw[1], pw[2], pw[3],   # conv0 w (3) + b
         1.0, 0.0,                     # bn gamma, beta
         pw[4], pw[5],                 # conv1 w, b
         pw[6], pw[7],                 # conv2 w, b
         0.1],                         # linear bias
        dtype=jnp.float32,
    )
    lin_w = jax.random.normal(k_l, (W, 1), dtype=jnp.float32) * 0.2

    out = conditional_embedding(t, params, lin_w)
    jax.block_until_ready(out)

    ref = reference(t, params, lin_w)
    assert out.shape == (B, H), out.shape
    assert jnp.allclose(out, ref, rtol=1e-4, atol=1e-4), jnp.max(jnp.abs(out - ref))
    print("KERNEL_OK")
</pallas_src>

<mosaic_0001>
module attributes {stable_mosaic.version = 11 : i64} {
  func.func @cond_embed_kernel(%arg0: memref<12xf32, #tpu.memory_space<smem>>, %arg1: memref<3x16x32xf32, #tpu.memory_space<vmem>>, %arg2: memref<16x1xf32, #tpu.memory_space<vmem>>, %arg3: memref<1x32xf32, #tpu.memory_space<vmem>>) attributes {dimension_semantics = [], scalar_prefetch = 0 : i64, scratch_operands = 0 : i64, tpu.core_type = #tpu.core_type<tc>} {
    %c0 = arith.constant 0 : index
    %0 = memref.load %arg0[%c0] : memref<12xf32, #tpu.memory_space<smem>>
    %c1 = arith.constant 1 : index
    %1 = memref.load %arg0[%c1] : memref<12xf32, #tpu.memory_space<smem>>
    %c2 = arith.constant 2 : index
    %2 = memref.load %arg0[%c2] : memref<12xf32, #tpu.memory_space<smem>>
    %c3 = arith.constant 3 : index
    %3 = memref.load %arg0[%c3] : memref<12xf32, #tpu.memory_space<smem>>
    %c4 = arith.constant 4 : index
    %4 = memref.load %arg0[%c4] : memref<12xf32, #tpu.memory_space<smem>>
    %c5 = arith.constant 5 : index
    %5 = memref.load %arg0[%c5] : memref<12xf32, #tpu.memory_space<smem>>
    %c6 = arith.constant 6 : index
    %6 = memref.load %arg0[%c6] : memref<12xf32, #tpu.memory_space<smem>>
    %c7 = arith.constant 7 : index
    %7 = memref.load %arg0[%c7] : memref<12xf32, #tpu.memory_space<smem>>
    %c8 = arith.constant 8 : index
    %8 = memref.load %arg0[%c8] : memref<12xf32, #tpu.memory_space<smem>>
    %c9 = arith.constant 9 : index
    %9 = memref.load %arg0[%c9] : memref<12xf32, #tpu.memory_space<smem>>
    %c10 = arith.constant 10 : index
    %10 = memref.load %arg0[%c10] : memref<12xf32, #tpu.memory_space<smem>>
    %c11 = arith.constant 11 : index
    %11 = memref.load %arg0[%c11] : memref<12xf32, #tpu.memory_space<smem>>
    %c0_0 = arith.constant 0 : index
    %c0_1 = arith.constant 0 : index
    %c0_2 = arith.constant 0 : index
    %12 = vector.load %arg1[%c0_0, %c0_1, %c0_2] : memref<3x16x32xf32, #tpu.memory_space<vmem>>, vector<1x16x32xf32>
    %13 = vector.shape_cast %12 : vector<1x16x32xf32> to vector<16x32xf32>
    %c1_3 = arith.constant 1 : index
    %c0_4 = arith.constant 0 : index
    %c0_5 = arith.constant 0 : index
    %14 = vector.load %arg1[%c1_3, %c0_4, %c0_5] : memref<3x16x32xf32, #tpu.memory_space<vmem>>, vector<1x16x32xf32>
    %15 = vector.shape_cast %14 : vector<1x16x32xf32> to vector<16x32xf32>
    %c2_6 = arith.constant 2 : index
    %c0_7 = arith.constant 0 : index
    %c0_8 = arith.constant 0 : index
    %16 = vector.load %arg1[%c2_6, %c0_7, %c0_8] : memref<3x16x32xf32, #tpu.memory_space<vmem>>, vector<1x16x32xf32>
    %17 = vector.shape_cast %16 : vector<1x16x32xf32> to vector<16x32xf32>
    %18 = vector.broadcast %0 : f32 to vector<16x32xf32>
    %19 = arith.mulf %13, %18 : vector<16x32xf32>
    %20 = vector.broadcast %1 : f32 to vector<16x32xf32>
    %21 = arith.mulf %15, %20 : vector<16x32xf32>
    %22 = arith.addf %19, %21 : vector<16x32xf32>
    %23 = vector.broadcast %2 : f32 to vector<16x32xf32>
    %24 = arith.mulf %17, %23 : vector<16x32xf32>
    %25 = arith.addf %22, %24 : vector<16x32xf32>
    %26 = vector.broadcast %3 : f32 to vector<16x32xf32>
    %27 = arith.addf %25, %26 : vector<16x32xf32>
    %28 = vector.shape_cast %27 : vector<16x32xf32> to vector<1x16x32xf32>
    %cst = arith.constant dense<0.000000e+00> : vector<1xf32>
    %29 = vector.multi_reduction <add>, %28, %cst [1, 2] : vector<1x16x32xf32> to vector<1xf32>
    %30 = vector.shape_cast %29 : vector<1xf32> to vector<1x1x1xf32>
    %31 = vector.extract %30[0, 0, 0] : f32 from vector<1x1x1xf32>
    %32 = arith.mulf %27, %27 : vector<16x32xf32>
    %33 = vector.shape_cast %32 : vector<16x32xf32> to vector<1x16x32xf32>
    %cst_9 = arith.constant dense<0.000000e+00> : vector<1xf32>
    %34 = vector.multi_reduction <add>, %33, %cst_9 [1, 2] : vector<1x16x32xf32> to vector<1xf32>
    %35 = vector.shape_cast %34 : vector<1xf32> to vector<1x1x1xf32>
    %36 = vector.extract %35[0, 0, 0] : f32 from vector<1x1x1xf32>
    %cst_10 = arith.constant 5.120000e+02 : f32
    %37 = arith.divf %31, %cst_10 : f32
    %cst_11 = arith.constant 5.120000e+02 : f32
    %38 = arith.divf %36, %cst_11 : f32
    %39 = arith.mulf %37, %37 : f32
    %40 = arith.subf %38, %39 : f32
    %cst_12 = arith.constant 9.99999974E-6 : f32
    %41 = arith.addf %40, %cst_12 : f32
    %42 = math.rsqrt %41 : f32
    %43 = arith.mulf %4, %42 : f32
    %44 = arith.mulf %37, %43 : f32
    %45 = arith.subf %5, %44 : f32
    %46 = vector.broadcast %43 : f32 to vector<16x32xf32>
    %47 = arith.mulf %27, %46 : vector<16x32xf32>
    %48 = vector.broadcast %45 : f32 to vector<16x32xf32>
    %49 = arith.addf %47, %48 : vector<16x32xf32>
    %cst_13 = arith.constant 5.000000e-01 : f32
    %50 = vector.broadcast %cst_13 : f32 to vector<16x32xf32>
    %51 = arith.mulf %50, %49 : vector<16x32xf32>
    %52 = math.tanh %51 : vector<16x32xf32>
    %cst_14 = arith.constant 5.000000e-01 : f32
    %53 = vector.broadcast %cst_14 : f32 to vector<16x32xf32>
    %54 = arith.mulf %53, %52 : vector<16x32xf32>
    %cst_15 = arith.constant 5.000000e-01 : f32
    %55 = vector.broadcast %cst_15 : f32 to vector<16x32xf32>
    %56 = arith.addf %54, %55 : vector<16x32xf32>
    %57 = arith.mulf %49, %56 : vector<16x32xf32>
    %58 = vector.broadcast %6 : f32 to vector<16x32xf32>
    %59 = arith.mulf %57, %58 : vector<16x32xf32>
    %60 = vector.broadcast %7 : f32 to vector<16x32xf32>
    %61 = arith.addf %59, %60 : vector<16x32xf32>
    %cst_16 = arith.constant 5.000000e-01 : f32
    %62 = vector.broadcast %cst_16 : f32 to vector<16x32xf32>
    %63 = arith.mulf %62, %61 : vector<16x32xf32>
    %64 = math.tanh %63 : vector<16x32xf32>
    %cst_17 = arith.constant 5.000000e-01 : f32
    %65 = vector.broadcast %cst_17 : f32 to vector<16x32xf32>
    %66 = arith.mulf %65, %64 : vector<16x32xf32>
    %cst_18 = arith.constant 5.000000e-01 : f32
    %67 = vector.broadcast %cst_18 : f32 to vector<16x32xf32>
    %68 = arith.addf %66, %67 : vector<16x32xf32>
    %69 = arith.mulf %61, %68 : vector<16x32xf32>
    %c0_19 = arith.constant 0 : index
    %c0_20 = arith.constant 0 : index
    %70 = vector.load %arg2[%c0_19, %c0_20] : memref<16x1xf32, #tpu.memory_space<vmem>>, vector<16x1xf32>
    %71 = vector.broadcast %70 : vector<16x1xf32> to vector<16x32xf32>
    %72 = arith.mulf %69, %71 : vector<16x32xf32>
    %cst_21 = arith.constant dense<0.000000e+00> : vector<32xf32>
    %73 = vector.multi_reduction <add>, %72, %cst_21 [0] : vector<16x32xf32> to vector<32xf32>
    %74 = vector.shape_cast %73 : vector<32xf32> to vector<1x32xf32>
    %75 = vector.broadcast %8 : f32 to vector<1x32xf32>
    %76 = arith.mulf %75, %74 : vector<1x32xf32>
    %77 = arith.mulf %9, %11 : f32
    %78 = arith.addf %77, %10 : f32
    %79 = vector.broadcast %78 : f32 to vector<1x32xf32>
    %80 = arith.addf %76, %79 : vector<1x32xf32>
    %c0_22 = arith.constant 0 : index
    %c0_23 = arith.constant 0 : index
    %81 = vector.load %arg3[%c0_22, %c0_23] : memref<1x32xf32, #tpu.memory_space<vmem>>, vector<1x32xf32>
    tpu.vector_store %arg3[%c0_22, %c0_23], %80 {strides = array<i32>} : memref<1x32xf32, #tpu.memory_space<vmem>>, vector<1x32xf32>,
    return
  }
}

</mosaic_0001>

<llo_original>
// kernel: tpu_custom_call.1
$region0: #{tpu_custom_call.1}
  #allocation0 [shape = 'u32[]', space=smem, size = 0x4, offset = 0x4, fixed_abs, tag = 'smem constant byte address 0x4 - core index']
  #allocation1 [shape = 'u32[144,128]{1,0:T(1,128)}', space=vmem, size = 0x12000, scoped, tag = 'internal scratch']
  %s0 = inlined_call_operand.vmem [shape: f32[12], index: 0, kind: input, shape index: {}]
  %s1 = inlined_call_operand.hbm [shape: f32[3,16,32], index: 1, kind: input, shape index: {}]
  %s2 = inlined_call_operand.vmem [shape: f32[16,1], index: 2, kind: input, shape index: {}]
  %s3 = inlined_call_operand.hbm [shape: f32[1,32], index: 3, kind: output, shape index: {}]
  %s4 = sld [smem:[#allocation0]]
  $region30: #{tpu_custom_call.1} parent=0
    _
  %s6 = ssub.s32 1, %s4
  %s7 = scalar_select 0, %s6, %s4
  $region1: #{tpu_custom_call.1} parent=0
    #allocation2 [shape = 'u8[512]{0}', space=smem, size = 0x200, scoped, tag = 'input window, operand 0, single buffered']
    #allocation3 [shape = 's32[1]{0}', space=sflag, size = 0x4, scoped, tag = 'scoped memory for tpu_custom_call.1']
    #allocation4 [shape = 's32[1]{0}', space=sflag, size = 0x4, scoped, tag = 'scoped memory for tpu_custom_call.1']
    #allocation5 [shape = 's32[1]{0}', space=sflag, size = 0x4, scoped, tag = 'scoped memory for tpu_custom_call.1']
    #allocation6 [shape = 'u8[24576]{0}', space=vmem, size = 0x6000, scoped, tag = 'input window, operand 1, single buffered']
    #allocation7 [shape = 'u8[512]{0}', space=vmem, size = 0x400, scoped, tag = 'output window, operand 0, single buffered']
    %8 = vsyncpa [#allocation5], 0
    %9 = vsyncpa [#allocation3], 0
    %10 = vsyncpa [#allocation4], 0
    // Predicated region
    $region2: #{tpu_custom_call.1} parent=1 // pred_check
      _
    $region3: #{tpu_custom_call.1} parent=1 // pred_check_branch
      %12 = sbr.rel (0) target = $region5
    $region4: #{tpu_custom_call.1} parent=1 // pred_region
      %s14 = ssub.s32 16, 16
      %15 = vsyncadd [#allocation5], %s14
      %s17 = sshll.u32 %s0, 4
      %s18 = int_to_ptr.vmem [resolvable:$true] %s17
      %20 = dma.vmem_to_smem %s18, 16, [#allocation2], [#allocation5]
    $region5: #{tpu_custom_call.1} parent=1 // pred_fallthru
      _
    // Predicated region
    $region6: #{tpu_custom_call.1} parent=1 // pred_check
      _
    $region7: #{tpu_custom_call.1} parent=1 // pred_check_branch
      %22 = sbr.rel (0) target = $region9
    $region8: #{tpu_custom_call.1} parent=1 // pred_region
      %s24 = ssub.s32 768, 768
      %25 = vsyncadd [#allocation3], %s24
      %s26 = sshll.u32 [#allocation6], 4
      %s27 = int_to_ptr.vmem [resolvable:$true] %s26
      %32 = dma.hbm_to_vmem [thread:$0]  %s1, 768, %s27, [#allocation3], 128, 128, 8
    $region9: #{tpu_custom_call.1} parent=1 // pred_fallthru
      _
    // Predicated region
    $region10: #{tpu_custom_call.1} parent=1 // pred_check
      _
    $region11: #{tpu_custom_call.1} parent=1 // pred_check_branch
      %34 = sbr.rel (0) target = $region13
    $region12: #{tpu_custom_call.1} parent=1 // pred_region
      _
    $region13: #{tpu_custom_call.1} parent=1 // pred_fallthru
      _
    // Predicated region
    $region14: #{tpu_custom_call.1} parent=1 // pred_check
      _
    $region15: #{tpu_custom_call.1} parent=1 // pred_check_branch
      %36 = sbr.rel (0) target = $region17
    $region16: #{tpu_custom_call.1} parent=1 // pred_region
      %37 = dma.done [#allocation5], 16
    $region17: #{tpu_custom_call.1} parent=1 // pred_fallthru
      _
    // Predicated region
    $region18: #{tpu_custom_call.1} parent=1 // pred_check
      _
    $region19: #{tpu_custom_call.1} parent=1 // pred_check_branch
      %39 = sbr.rel (0) target = $region21
    $region20: #{tpu_custom_call.1} parent=1 // pred_region
      %40 = dma.done [#allocation3], 768
    $region21: #{tpu_custom_call.1} parent=1 // pred_fallthru
      _
    %41 = sfence
    %s42 = sld [smem:[#allocation2]]
    %s43 = sld [smem:[#allocation2 + $0x1]]
    %s44 = sld [smem:[#allocation2 + $0x2]]
    %s45 = sld [smem:[#allocation2 + $0x3]]
    %s46 = sld [smem:[#allocation2 + $0x4]]
    %s47 = sld [smem:[#allocation2 + $0x5]]
    %s48 = sld [smem:[#allocation2 + $0x6]]
    %s49 = sld [smem:[#allocation2 + $0x7]]
    %s50 = sld [smem:[#allocation2 + $0x8]]
    %s51 = sld [smem:[#allocation2 + $0x9]]
    %s52 = sld [smem:[#allocation2 + $0xa]]
    %s53 = sld [smem:[#allocation2 + $0xb]]
    %v54 = vld [vmem:[#allocation6] sm:$0xff]
    %v55 = vld [vmem:[#allocation6 + $0x8] sm:$0xff]
    %s56 = scalar_lea.vmem [#allocation6], 16
    %v57 = vld [vmem:[%s56] sm:$0xff]
    %v58 = vld [vmem:[%s56 + $0x8] sm:$0xff]
    %s59 = scalar_lea.vmem [#allocation6], 32
    %v60 = vld [vmem:[%s59] sm:$0xff]
    %v61 = vld [vmem:[%s59 + $0x8] sm:$0xff]
    %v62 = vstv %s42
    %v63 = vmul.f32 %v54, %v62
    %v64 = vmul.f32 %v55, %v62
    %v65 = vstv %s43
    %v66 = vmul.f32 %v57, %v65
    %v67 = vmul.f32 %v58, %v65
    %v68 = vadd.f32 %v63, %v66
    %v69 = vadd.f32 %v64, %v67
    %v70 = vstv %s44
    %v71 = vmul.f32 %v60, %v70
    %v72 = vmul.f32 %v61, %v70
    %v73 = vadd.f32 %v68, %v71
    %v74 = vadd.f32 %v69, %v72
    %v75 = vstv %s45
    %v76 = vadd.f32 %v73, %v75
    %v77 = vadd.f32 %v74, %v75
    %vm78 = vcmask 261120
    %v79 = vsel %vm78, %v76, 0.0
    %v80 = vsel %vm78, %v77, 0.0
    %v81 = vadd.f32 %v79, %v80
    %82 = vadd.xlane.f32.xlu0 %v81
    %v83 = vpop.xlane.xlu0 %82
    %v84 = vrot.slane %v83, 4
    %v85 = vadd.f32 %v83, %v84
    %v86 = vrot.slane %v85, 2
    %v87 = vadd.f32 %v85, %v86
    %v88 = vrot.slane %v87, 1
    %v89 = vadd.f32 %v87, %v88
    %s90 = vtos %v89
    %v91 = vmul.f32 %v76, %v76
    %v92 = vmul.f32 %v77, %v77
    %v93 = vsel %vm78, %v91, 0.0
    %v94 = vsel %vm78, %v92, 0.0
    %v95 = vadd.f32 %v93, %v94
    %96 = vadd.xlane.f32.xlu0 %v95
    %v97 = vpop.xlane.xlu0 %96
    %v98 = vrot.slane %v97, 4
    %v99 = vadd.f32 %v97, %v98
    %v100 = vrot.slane %v99, 2
    %v101 = vadd.f32 %v99, %v100
    %v102 = vrot.slane %v101, 1
    %v103 = vadd.f32 %v101, %v102
    %s104 = vtos %v103
    %v105 = vrcp.pop 512.0
    %s106 = vtos %v105
    %s107 = smul.f32 %s90, %s106
    %v108 = vrcp.pop 512.0
    %s109 = vtos %v108
    %s110 = smul.f32 %s104, %s109
    %s111 = smul.f32 %s107, %s107
    %s112 = ssub.f32 %s110, %s111
    %s113 = sadd.f32 %s112, 1e-05
    %v114 = vstv %s113
    %v115 = vrsqrt.pop %v114
    %s116 = vtos %v115
    %s117 = smul.f32 %s46, %s116
    %s118 = smul.f32 %s107, %s117
    %s119 = ssub.f32 %s47, %s118
    %v120 = vstv %s117
    %v121 = vmul.f32 %v76, %v120
    %v122 = vmul.f32 %v77, %v120
    %v123 = vstv %s119
    %v124 = vadd.f32 %v121, %v123
    %v125 = vadd.f32 %v122, %v123
    %v126 = vmul.f32 %v124, 0.5
    %v127 = vmul.f32 %v125, 0.5
    %v128 = vtanh.pop %v126
    %v129 = vtanh.pop %v127
    %v130 = vmul.f32 %v128, 0.5
    %v131 = vmul.f32 %v129, 0.5
    %v132 = vadd.f32 %v130, 0.5
    %v133 = vadd.f32 %v131, 0.5
    %v134 = vmul.f32 %v124, %v132
    %v135 = vmul.f32 %v125, %v133
    %v136 = vstv %s48
    %v137 = vmul.f32 %v134, %v136
    %v138 = vmul.f32 %v135, %v136
    %v139 = vstv %s49
    %v140 = vadd.f32 %v137, %v139
    %v141 = vadd.f32 %v138, %v139
    %v142 = vmul.f32 %v140, 0.5
    %v143 = vmul.f32 %v141, 0.5
    %v144 = vtanh.pop %v142
    %v145 = vtanh.pop %v143
    %v146 = vmul.f32 %v144, 0.5
    %v147 = vmul.f32 %v145, 0.5
    %v148 = vadd.f32 %v146, 0.5
    %v149 = vadd.f32 %v147, 0.5
    %v150 = vmul.f32 %v140, %v148
    %v151 = vmul.f32 %v141, %v149
    %v152 = vld [vmem:[%s2] sm:$0xff]
    %v153 = vld [vmem:[%s2 + $0x8] sm:$0xff]
    %155 = vset.pattern.permute.xlu0 0
    %156 = vperm.xlu0 %155, %v152
    %v157 = vpop.permute.xlu0 %156
    %160 = vset.pattern.permute.xlu0 0
    %161 = vperm.xlu0 %160, %v153
    %v162 = vpop.permute.xlu0 %161
    %v164 = vmul.f32 %v150, %v157
    %v165 = vmul.f32 %v151, %v162
    %v166 = vsel %vm78, %v164, 0.0
    %v167 = vsel %vm78, %v165, 0.0
    %v168 = vadd.f32 %v166, %v167
    %v169 = vrot.slane %v168, 4
    %v170 = vadd.f32 %v168, %v169
    %v171 = vrot.slane %v170, 2
    %v172 = vadd.f32 %v170, %v171
    %v173 = vrot.slane %v172, 1
    %v174 = vadd.f32 %v172, %v173
    %v175 = vstv %s50
    %v176 = vmul.f32 %v175, %v174
    %s177 = smul.f32 %s51, %s53
    %s178 = sadd.f32 %s177, %s52
    %v179 = vstv %s178
    %v180 = vadd.f32 %v176, %v179
    %vm181 = vcmask 253952
    %182 = vst.msk [vmem:[#allocation7] sm:$0x1] %vm181, %v180
    // Predicated region
    $region22: #{tpu_custom_call.1} parent=1 // pred_check
      _
    $region23: #{tpu_custom_call.1} parent=1 // pred_check_branch
      %184 = sbr.rel (0) target = $region25
    $region24: #{tpu_custom_call.1} parent=1 // pred_region
      %s186 = ssub.s32 16, 16
      %187 = vsyncadd [#allocation4], %s186
      %s189 = sshll.u32 [#allocation7], 4
      %s190 = int_to_ptr.vmem [resolvable:$true] %s189
      %192 = dma.vmem_to_hbm [thread:$0]  %s190, 16, %s3, [#allocation4]
    $region25: #{tpu_custom_call.1} parent=1 // pred_fallthru
      _
    // Predicated region
    $region26: #{tpu_custom_call.1} parent=1 // pred_check
      _
    $region27: #{tpu_custom_call.1} parent=1 // pred_check_branch
      %194 = sbr.rel (0) target = $region29
    $region28: #{tpu_custom_call.1} parent=1 // pred_region
      %195 = dma.done [#allocation4], 16
    $region29: #{tpu_custom_call.1} parent=1 // pred_fallthru
      _
    %196 = vsyncpa [#allocation3], 1
    %197 = vsyncpa [#allocation4], 1
    %198 = vsyncpa [#allocation5], 1

</llo_original>
